<compile_context>
chip_gen: v5e
topology: v5e:2x2
jax: 0.10.0
libtpu: 0.0.40
codegen_flags: <defaults>
</compile_context>

<pallas_src>
import math

import jax
import jax.numpy as jnp
from jax.experimental import pallas as pl
from jax.experimental.pallas import tpu as pltpu

S = 56   # sequence length implied by mask shape (1, 56, 56)
D = 64   # feature dim implied by self.q / self.v shape (1, 1, 64)


def _attn_collapsed_kernel(v_ref, o_ref):
    # v_ref: (1, 1, D) f32, o_ref: (1, S, D) f32 — whole arrays resident in VMEM.
    # attn @ broadcast(v) == rowsum(attn)[:, None] * v == broadcast(v)
    # (rowsum of a softmax row is identically 1), so the output is a single
    # sublane broadcast of v.  See header for the full derivation.
    o_ref[...] = jnp.broadcast_to(v_ref[...], o_ref.shape)


def model_forward(q, q_param, mask, v_param):
    """q: (1,S,D) f32, q_param: (1,1,D) f32, mask: (1,S,S) bool, v_param: (1,1,D) f32.

    q, q_param and mask are mathematically dead for this module's forward:
    the (S,1) qk cancels in the row softmax and the softmax rows sum to 1,
    so the output equals broadcast(v_param).  They are accepted here only to
    keep the original module's call signature.
    """
    del q, q_param, mask  # exact algebraic cancellation (see module docstring)
    return pl.pallas_call(
        _attn_collapsed_kernel,
        out_shape=jax.ShapeDtypeStruct((1, S, D), jnp.float32),
        in_specs=[pl.BlockSpec(memory_space=pltpu.MemorySpace.VMEM)],
        out_specs=pl.BlockSpec(memory_space=pltpu.MemorySpace.VMEM),
    )(v_param)


def _reference(q, q_param, mask, v_param):
    # Full-precision pure-JAX reference of the original (repaired) pipeline.
    qk = jnp.matmul(q, jnp.swapaxes(q_param, -2, -1),
                    precision=jax.lax.Precision.HIGHEST) / math.sqrt(D)
    qk = qk + mask.astype(jnp.float32)
    attn = jax.nn.softmax(qk, axis=-1)
    v_full = jnp.broadcast_to(v_param, (1, S, D))
    return jnp.matmul(attn, v_full, precision=jax.lax.Precision.HIGHEST)


if __name__ == "__main__":
    key = jax.random.PRNGKey(0)
    k_q, k_qp, k_vp, k_mask = jax.random.split(key, 4)

    # module parameters (deterministic, matching __init__ shapes)
    q_param = jax.random.uniform(k_qp, (1, 1, D), dtype=jnp.float32) * 10.0
    v_param = jax.random.uniform(k_vp, (1, 1, D), dtype=jnp.float32) * 10.0
    mask = jax.random.uniform(k_mask, (1, S, S), dtype=jnp.float32) > 0.7

    # forward input
    q = jax.random.uniform(k_q, (1, S, D), dtype=jnp.float32)

    out = model_forward(q, q_param, mask, v_param)
    out = jax.block_until_ready(out)

    ref = _reference(q, q_param, mask, v_param)
    assert out.shape == (1, S, D)
    assert jnp.allclose(out, ref, atol=1e-4, rtol=1e-4)

    print("KERNEL_OK")
</pallas_src>

<mosaic_0001>
module attributes {stable_mosaic.version = 11 : i64} {
  func.func @_attn_collapsed_kernel(%arg0: memref<1x1x64xf32, #tpu.memory_space<vmem>>, %arg1: memref<1x56x64xf32, #tpu.memory_space<vmem>>) attributes {dimension_semantics = [], scalar_prefetch = 0 : i64, scratch_operands = 0 : i64, tpu.core_type = #tpu.core_type<tc>} {
    %c0 = arith.constant 0 : index
    %c0_0 = arith.constant 0 : index
    %c0_1 = arith.constant 0 : index
    %0 = vector.load %arg0[%c0, %c0_0, %c0_1] : memref<1x1x64xf32, #tpu.memory_space<vmem>>, vector<1x1x64xf32>
    %1 = vector.shape_cast %0 : vector<1x1x64xf32> to vector<1x1x64xf32>
    %2 = vector.broadcast %1 : vector<1x1x64xf32> to vector<1x56x64xf32>
    %c0_2 = arith.constant 0 : index
    %c0_3 = arith.constant 0 : index
    %c0_4 = arith.constant 0 : index
    %3 = vector.load %arg1[%c0_2, %c0_3, %c0_4] : memref<1x56x64xf32, #tpu.memory_space<vmem>>, vector<1x56x64xf32>
    tpu.vector_store %arg1[%c0_2, %c0_3, %c0_4], %2 {strides = array<i32>} : memref<1x56x64xf32, #tpu.memory_space<vmem>>, vector<1x56x64xf32>,
    return
  }
}

</mosaic_0001>

<llo_original>
// kernel: tpu_custom_call.1
$region0: #{tpu_custom_call.1}
  #allocation0 [shape = 'u32[]', space=smem, size = 0x4, offset = 0x4, fixed_abs, tag = 'smem constant byte address 0x4 - core index']
  #allocation1 [shape = 'u32[72,128]{1,0:T(1,128)}', space=vmem, size = 0x9000, scoped, tag = 'internal scratch']
  %s0 = inlined_call_operand.hbm [shape: f32[1,1,64], index: 0, kind: input, shape index: {}]
  %s1 = inlined_call_operand.hbm [shape: f32[1,56,64], index: 1, kind: output, shape index: {}]
  %s2 = sld [smem:[#allocation0]]
  $region18: #{tpu_custom_call.1} parent=0
    _
  %s4 = ssub.s32 1, %s2
  %s5 = scalar_select 0, %s4, %s2
  $region1: #{tpu_custom_call.1} parent=0
    #allocation2 [shape = 'u8[512]{0}', space=vmem, size = 0x400, scoped, tag = 'input window, operand 0, single buffered']
    #allocation3 [shape = 's32[1]{0}', space=sflag, size = 0x4, scoped, tag = 'scoped memory for tpu_custom_call.1']
    #allocation4 [shape = 's32[1]{0}', space=sflag, size = 0x4, scoped, tag = 'scoped memory for tpu_custom_call.1']
    #allocation5 [shape = 'u8[28672]{0}', space=vmem, size = 0x7000, scoped, tag = 'output window, operand 0, single buffered']
    %6 = vsyncpa [#allocation3], 0
    %7 = vsyncpa [#allocation4], 0
    // Predicated region
    $region2: #{tpu_custom_call.1} parent=1 // pred_check
      _
    $region3: #{tpu_custom_call.1} parent=1 // pred_check_branch
      %9 = sbr.rel (0) target = $region5
    $region4: #{tpu_custom_call.1} parent=1 // pred_region
      %11 = vsyncadd [#allocation3], 0
      %s13 = sshll.u32 %s0, 4
      %s14 = int_to_ptr.hbm [resolvable:$true] %s13
      %s15 = sshll.u32 [#allocation2], 4
      %s16 = int_to_ptr.vmem [resolvable:$true] %s15
      %18 = dma.hbm_to_vmem [thread:$0]  %s14, 16, %s16, [#allocation3]
    $region5: #{tpu_custom_call.1} parent=1 // pred_fallthru
      _
    // Predicated region
    $region6: #{tpu_custom_call.1} parent=1 // pred_check
      _
    $region7: #{tpu_custom_call.1} parent=1 // pred_check_branch
      %20 = sbr.rel (0) target = $region9
    $region8: #{tpu_custom_call.1} parent=1 // pred_region
      %22 = dma.done [#allocation3], 16
    $region9: #{tpu_custom_call.1} parent=1 // pred_fallthru
      _
    %v23 = vld [vmem:[#allocation2] sm:$0x1]
    %v25 = vperm.slane %v23, 0
    %vm27 = vcmask 523264
    %28 = vst.msk [vmem:[#allocation5] sm:$0xff] %vm27, %v25
    %29 = vst.msk [vmem:[#allocation5 + $0x8] sm:$0xff] %vm27, %v25
    %30 = vst.msk [vmem:[#allocation5 + $0x10] sm:$0xff] %vm27, %v25
    %31 = vst.msk [vmem:[#allocation5 + $0x18] sm:$0xff] %vm27, %v25
    %32 = vst.msk [vmem:[#allocation5 + $0x20] sm:$0xff] %vm27, %v25
    %33 = vst.msk [vmem:[#allocation5 + $0x28] sm:$0xff] %vm27, %v25
    %34 = vst.msk [vmem:[#allocation5 + $0x30] sm:$0xff] %vm27, %v25
    // Predicated region
    $region10: #{tpu_custom_call.1} parent=1 // pred_check
      _
    $region11: #{tpu_custom_call.1} parent=1 // pred_check_branch
      %36 = sbr.rel (0) target = $region13
    $region12: #{tpu_custom_call.1} parent=1 // pred_region
      %38 = vsyncadd [#allocation4], 0
      %s39 = sshll.u32 [#allocation5], 4
      %s40 = int_to_ptr.vmem [resolvable:$true] %s39
      %s41 = sshll.u32 %s1, 4
      %s42 = int_to_ptr.hbm [resolvable:$true] %s41
      %47 = dma.vmem_to_hbm [thread:$0]  %s40, 896, %s42, [#allocation4], 128, 128, 8
    $region13: #{tpu_custom_call.1} parent=1 // pred_fallthru
      _
    // Predicated region
    $region14: #{tpu_custom_call.1} parent=1 // pred_check
      _
    $region15: #{tpu_custom_call.1} parent=1 // pred_check_branch
      %49 = sbr.rel (0) target = $region17
    $region16: #{tpu_custom_call.1} parent=1 // pred_region
      %51 = dma.done [#allocation4], 896
    $region17: #{tpu_custom_call.1} parent=1 // pred_fallthru
      _
    %52 = vsyncpa [#allocation3], 1
    %53 = vsyncpa [#allocation4], 1

</llo_original>
